<compile_context>
chip_gen: v7x
topology: tpu7x:2x2x1
jax: 0.10.0
libtpu: 0.0.40
codegen_flags: <defaults>
</compile_context>

<pallas_src>
import functools

import jax
import jax.numpy as jnp
from jax.experimental import pallas as pl
from jax.experimental.pallas import tpu as pltpu

D_HIDDEN = 128  # AttentionGated.D (hard-coded in the module)


def _dattention_kernel(x_ref, wab_ref, wc_ref, out_ref,
                       m_sc, l_sc, acc_sc, *, l_valid, tile_l):
    """One (batch-tile, L-tile) step of the gated-attention pooling.

    x_ref:   (B, TL, Din) f32 block
    wab_ref: (Din, 256)   fused, pre-transposed [Wa^T | Wb^T]
    wc_ref:  (1, 128)     attention_c weight row
    out_ref: (B, Din)     pooled output (written at the last L step)
    scratch: m_sc (B,1), l_sc (B,1), acc_sc (B,Din)  -- online-softmax state
    """
    t = pl.program_id(1)
    nt = pl.num_programs(1)

    @pl.when(t == 0)
    def _():
        m_sc[...] = jnp.full(m_sc.shape, -jnp.inf, dtype=jnp.float32)
        l_sc[...] = jnp.zeros(l_sc.shape, jnp.float32)
        acc_sc[...] = jnp.zeros(acc_sc.shape, jnp.float32)

    x = x_ref[...]                                     # [B, TL, Din]
    B, TL, Din = x.shape

    # Fused a/b projection: a single MXU pass against the [Din, 256] weight.
    x2 = x.reshape(B * TL, Din)
    ab = jnp.dot(x2, wab_ref[...], preferred_element_type=jnp.float32)  # [B*TL, 256]
    a = jnp.maximum(ab[:, :D_HIDDEN], 0.0)             # ReLU (VPU)
    b = jax.nn.sigmoid(ab[:, D_HIDDEN:])               # sigmoid (EUP)
    gated = (a * b).reshape(B, TL, D_HIDDEN)           # [B, TL, 128]

    # attention_c: N=1 matmul replaced by VPU multiply + lane reduce (XLU).
    s = jnp.sum(gated * wc_ref[...].reshape(1, 1, D_HIDDEN), axis=-1)  # [B, TL]

    if l_valid is not None:
        # Mask out zero-padded sequence positions (only bites on the last tile;
        # on full tiles the compare is trivially true -> cheap no-op).
        col = jax.lax.broadcasted_iota(jnp.int32, (B, TL), 1) + t * tile_l
        s = jnp.where(col < l_valid, s, jnp.float32(-1e30))

    # Online softmax over the (tiled) L axis.
    m_old = m_sc[...]                                          # [B, 1]
    m_new = jnp.maximum(m_old, jnp.max(s, axis=-1, keepdims=True))
    alpha = jnp.exp(m_old - m_new)                             # [B, 1]
    p = jnp.exp(s - m_new)                                     # [B, TL]
    l_sc[...] = alpha * l_sc[...] + jnp.sum(p, axis=-1, keepdims=True)
    # Pooling on the VPU + sublane-reduce path (MXU stays free for projection).
    acc_sc[...] = alpha * acc_sc[...] + jnp.sum(p[:, :, None] * x, axis=1)
    m_sc[...] = m_new

    @pl.when(t == nt - 1)
    def _():
        out_ref[...] = (acc_sc[...] *
                        pl.reciprocal(l_sc[...], approx=False)).astype(out_ref.dtype)


def dattention_forward(x, wa, wb, wc, *, block_b=8, block_l=512):
    """x: [N, L, Din] f32; wa/wb: [128, Din]; wc: [1, 128] -> [N, Din]."""
    N, L, Din = x.shape

    # Batch tile (B rows of output per grid step; lane/sublane-dense stores).
    if N >= block_b:
        B = max(8, (block_b // 8) * 8)
    else:
        B = N
    n_pad = -(-N // B) * B

    # Sequence tile (flash-style online softmax over L).
    if block_l >= L:
        TL = L
    else:
        TL = max(8, (block_l // 8) * 8)
    l_pad = -(-L // TL) * TL

    if (n_pad, l_pad) != (N, L):
        x = jnp.pad(x, ((0, n_pad - N), (0, l_pad - L), (0, 0)))

    # Pre-transposed fused projection weight [Din, 256]; no in-kernel .T.
    wab = jnp.concatenate([wa.T, wb.T], axis=1)
    wc_row = wc.reshape(1, D_HIDDEN)

    grid = (n_pad // B, l_pad // TL)

    kernel = functools.partial(
        _dattention_kernel,
        l_valid=(L if l_pad != L else None),
        tile_l=TL,
    )

    f32 = 4
    vmem_est = (2 * B * TL * Din          # double-buffered x tile
                + 2 * Din * 2 * D_HIDDEN  # double-buffered fused weight
                + 2 * D_HIDDEN            # wc
                + 2 * B * Din             # output block
                + 2 * B + B * Din) * f32  # scratch
    vmem_limit = int(min(100 * 1024 * 1024,
                         max(32 * 1024 * 1024, 2 * vmem_est)))

    cost = pl.CostEstimate(
        flops=(2 * n_pad * l_pad * Din * 2 * D_HIDDEN   # fused projection
               + 4 * n_pad * l_pad * D_HIDDEN           # gate mul + score reduce
               + 2 * n_pad * l_pad * Din),              # pooling
        transcendentals=n_pad * l_pad * (D_HIDDEN + 1),  # sigmoid + exp
        bytes_accessed=(n_pad * l_pad * Din + Din * 2 * D_HIDDEN
                        + D_HIDDEN + n_pad * Din) * f32,
    )

    out = pl.pallas_call(
        kernel,
        out_shape=jax.ShapeDtypeStruct((n_pad, Din), x.dtype),
        grid_spec=pltpu.PrefetchScalarGridSpec(
            num_scalar_prefetch=0,
            grid=grid,
            in_specs=[
                pl.BlockSpec((B, TL, Din), lambda n, t: (n, t, 0)),
                pl.BlockSpec((Din, 2 * D_HIDDEN), lambda n, t: (0, 0)),
                pl.BlockSpec((1, D_HIDDEN), lambda n, t: (0, 0)),
            ],
            out_specs=pl.BlockSpec((B, Din), lambda n, t: (n, 0)),
            scratch_shapes=[
                pltpu.VMEM((B, 1), jnp.float32),     # running max
                pltpu.VMEM((B, 1), jnp.float32),     # running denom
                pltpu.VMEM((B, Din), jnp.float32),   # running weighted sum
            ],
        ),
        compiler_params=pltpu.CompilerParams(
            dimension_semantics=("parallel", "arbitrary"),
            vmem_limit_bytes=vmem_limit,
        ),
        cost_estimate=cost,
    )(x, wab, wc_row)

    return out[:N]


def dattention_ref(x, wa, wb, wc):
    """Pure-JAX reference mirroring the PyTorch forward."""
    a = jax.nn.relu(jnp.einsum('nld,kd->nlk', x, wa))
    b = jax.nn.sigmoid(jnp.einsum('nld,kd->nlk', x, wb))
    s = jnp.einsum('nlk,ok->nlo', a * b, wc)             # [N, L, 1]
    A = jnp.swapaxes(s, -1, -2)                           # [N, 1, L]
    A = jax.nn.softmax(A, axis=-1)
    out = jnp.matmul(A, x)                                # [N, 1, Din]
    return out.squeeze(1)                                 # [N, Din]


if __name__ == "__main__":
    key = jax.random.PRNGKey(0)
    k_x, k_a, k_b, k_c, k_x2 = jax.random.split(key, 5)

    # --- test 1: small shapes, single L tile -------------------------------
    N, L, Din = 2, 8, 32   # AttentionGated hidden dim stays 128
    x = jax.random.normal(k_x, (N, L, Din), dtype=jnp.float32)
    wa = jax.random.normal(k_a, (D_HIDDEN, Din), dtype=jnp.float32) * 0.05
    wb = jax.random.normal(k_b, (D_HIDDEN, Din), dtype=jnp.float32) * 0.05
    wc = jax.random.normal(k_c, (1, D_HIDDEN), dtype=jnp.float32) * 0.05

    out = jax.block_until_ready(dattention_forward(x, wa, wb, wc))
    ref = dattention_ref(x, wa, wb, wc)
    assert out.shape == (N, Din)
    assert jnp.allclose(out, ref, atol=1e-5, rtol=1e-5), "mismatch vs reference (test 1)"

    # --- test 2: exercises the L-tiled online softmax + padding mask -------
    N2, L2 = 3, 20
    x2 = jax.random.normal(k_x2, (N2, L2, Din), dtype=jnp.float32)
    out2 = jax.block_until_ready(
        dattention_forward(x2, wa, wb, wc, block_l=8))
    ref2 = dattention_ref(x2, wa, wb, wc)
    assert out2.shape == (N2, Din)
    assert jnp.allclose(out2, ref2, atol=1e-5, rtol=1e-5), "mismatch vs reference (test 2)"

    print("KERNEL_OK")
</pallas_src>

<mosaic_0001>
module attributes {stable_mosaic.version = 11 : i64} {
  func.func @_dattention_kernel(%arg0: i32, %arg1: i32, %arg2: memref<2x8x32xf32, #tpu.memory_space<vmem>>, %arg3: memref<32x256xf32, #tpu.memory_space<vmem>>, %arg4: memref<1x128xf32, #tpu.memory_space<vmem>>, %arg5: memref<2x32xf32, #tpu.memory_space<vmem>>, %arg6: memref<2x1xf32, #tpu.memory_space<vmem>>, %arg7: memref<2x1xf32, #tpu.memory_space<vmem>>, %arg8: memref<2x32xf32, #tpu.memory_space<vmem>>) attributes {dimension_semantics = [#tpu.dimension_semantics<parallel>, #tpu.dimension_semantics<arbitrary>], iteration_bounds = array<i64: 1, 1>, scalar_prefetch = 0 : i64, scratch_operands = 3 : i64, tpu.core_type = #tpu.core_type<tc>, window_params = [{transform_indices = @transform_0, window_bounds = array<i64: 2, 8, 32>}, {pipeline_mode = #tpu.pipeline_mode<synchronous>, transform_indices = @transform_1, window_bounds = array<i64: 32, 256>}, {pipeline_mode = #tpu.pipeline_mode<synchronous>, transform_indices = @transform_2, window_bounds = array<i64: 1, 128>}, {transform_indices = @transform_3, window_bounds = array<i64: 2, 32>}]} {
    %c0_i32 = arith.constant 0 : i32
    %0 = arith.cmpi eq, %arg1, %c0_i32 : i32
    %1 = arith.extui %0 : i1 to i32
    %c0_i32_0 = arith.constant 0 : i32
    %2 = arith.cmpi ne, %1, %c0_i32_0 : i32
    scf.if %2 {
      %cst_27 = arith.constant 0xFF800000 : f32
      %51 = vector.broadcast %cst_27 : f32 to vector<2x1xf32>
      %c0_28 = arith.constant 0 : index
      %c0_29 = arith.constant 0 : index
      %52 = vector.load %arg6[%c0_28, %c0_29] : memref<2x1xf32, #tpu.memory_space<vmem>>, vector<2x1xf32>
      tpu.vector_store %arg6[%c0_28, %c0_29], %51 {strides = array<i32>} : memref<2x1xf32, #tpu.memory_space<vmem>>, vector<2x1xf32>,
      %cst_30 = arith.constant 0.000000e+00 : f32
      %53 = vector.broadcast %cst_30 : f32 to vector<2x1xf32>
      %c0_31 = arith.constant 0 : index
      %c0_32 = arith.constant 0 : index
      %54 = vector.load %arg7[%c0_31, %c0_32] : memref<2x1xf32, #tpu.memory_space<vmem>>, vector<2x1xf32>
      tpu.vector_store %arg7[%c0_31, %c0_32], %53 {strides = array<i32>} : memref<2x1xf32, #tpu.memory_space<vmem>>, vector<2x1xf32>,
      %cst_33 = arith.constant 0.000000e+00 : f32
      %55 = vector.broadcast %cst_33 : f32 to vector<2x32xf32>
      %c0_34 = arith.constant 0 : index
      %c0_35 = arith.constant 0 : index
      %56 = vector.load %arg8[%c0_34, %c0_35] : memref<2x32xf32, #tpu.memory_space<vmem>>, vector<2x32xf32>
      tpu.vector_store %arg8[%c0_34, %c0_35], %55 {strides = array<i32>} : memref<2x32xf32, #tpu.memory_space<vmem>>, vector<2x32xf32>,
    } else {
    }
    %c0 = arith.constant 0 : index
    %c0_1 = arith.constant 0 : index
    %c0_2 = arith.constant 0 : index
    %3 = vector.load %arg2[%c0, %c0_1, %c0_2] : memref<2x8x32xf32, #tpu.memory_space<vmem>>, vector<2x8x32xf32>
    %4 = vector.shape_cast %3 : vector<2x8x32xf32> to vector<16x32xf32>
    %c0_3 = arith.constant 0 : index
    %c0_4 = arith.constant 0 : index
    %5 = vector.load %arg3[%c0_3, %c0_4] : memref<32x256xf32, #tpu.memory_space<vmem>>, vector<32x256xf32>
    %cst = arith.constant dense<0.000000e+00> : vector<16x256xf32>
    %6 = tpu.matmul %4, %5, %cst {dimension_numbers = #tpu.dot_dimension_numbers<[1], [0], [0], [1], [0, 0, 1, 1], [], []>} : vector<16x32xf32>, vector<32x256xf32>, vector<16x256xf32> -> vector<16x256xf32>
    %7 = vector.extract_strided_slice %6 {offsets = [0, 0], sizes = [16, 128], strides = [1, 1]} : vector<16x256xf32> to vector<16x128xf32>
    %cst_5 = arith.constant 0.000000e+00 : f32
    %8 = vector.broadcast %cst_5 : f32 to vector<16x128xf32>
    %9 = arith.maximumf %7, %8 : vector<16x128xf32>
    %10 = vector.extract_strided_slice %6 {offsets = [0, 128], sizes = [16, 128], strides = [1, 1]} : vector<16x256xf32> to vector<16x128xf32>
    %11 = arith.negf %10 : vector<16x128xf32>
    %12 = math.exp %11 : vector<16x128xf32>
    %cst_6 = arith.constant 1.000000e+00 : f32
    %13 = vector.broadcast %cst_6 : f32 to vector<16x128xf32>
    %14 = arith.addf %13, %12 : vector<16x128xf32>
    %15 = arith.divf %13, %14 : vector<16x128xf32>
    %16 = arith.mulf %9, %15 : vector<16x128xf32>
    %17 = vector.shape_cast %16 : vector<16x128xf32> to vector<2x8x128xf32>
    %c0_7 = arith.constant 0 : index
    %c0_8 = arith.constant 0 : index
    %18 = vector.load %arg4[%c0_7, %c0_8] : memref<1x128xf32, #tpu.memory_space<vmem>>, vector<1x128xf32>
    %19 = vector.shape_cast %18 : vector<1x128xf32> to vector<1x1x128xf32>
    %20 = vector.broadcast %19 : vector<1x1x128xf32> to vector<2x8x128xf32>
    %21 = arith.mulf %17, %20 : vector<2x8x128xf32>
    %cst_9 = arith.constant dense<0.000000e+00> : vector<2x8xf32>
    %22 = vector.multi_reduction <add>, %21, %cst_9 [2] : vector<2x8x128xf32> to vector<2x8xf32>
    %c0_10 = arith.constant 0 : index
    %c0_11 = arith.constant 0 : index
    %23 = vector.load %arg6[%c0_10, %c0_11] : memref<2x1xf32, #tpu.memory_space<vmem>>, vector<2x1xf32>
    %cst_12 = arith.constant dense<0xFF800000> : vector<2xf32>
    %24 = vector.multi_reduction <maximumf>, %22, %cst_12 [1] : vector<2x8xf32> to vector<2xf32>
    %25 = vector.shape_cast %24 : vector<2xf32> to vector<2x1xf32>
    %26 = arith.maximumf %23, %25 : vector<2x1xf32>
    %27 = arith.subf %23, %26 : vector<2x1xf32>
    %28 = math.exp %27 : vector<2x1xf32>
    %29 = vector.broadcast %26 : vector<2x1xf32> to vector<2x8xf32>
    %30 = arith.subf %22, %29 : vector<2x8xf32>
    %31 = math.exp %30 : vector<2x8xf32>
    %c0_13 = arith.constant 0 : index
    %c0_14 = arith.constant 0 : index
    %32 = vector.load %arg7[%c0_13, %c0_14] : memref<2x1xf32, #tpu.memory_space<vmem>>, vector<2x1xf32>
    %33 = arith.mulf %28, %32 : vector<2x1xf32>
    %cst_15 = arith.constant dense<0.000000e+00> : vector<2xf32>
    %34 = vector.multi_reduction <add>, %31, %cst_15 [1] : vector<2x8xf32> to vector<2xf32>
    %35 = vector.shape_cast %34 : vector<2xf32> to vector<2x1xf32>
    %36 = arith.addf %33, %35 : vector<2x1xf32>
    %c0_16 = arith.constant 0 : index
    %c0_17 = arith.constant 0 : index
    %37 = vector.load %arg7[%c0_16, %c0_17] : memref<2x1xf32, #tpu.memory_space<vmem>>, vector<2x1xf32>
    tpu.vector_store %arg7[%c0_16, %c0_17], %36 {strides = array<i32>} : memref<2x1xf32, #tpu.memory_space<vmem>>, vector<2x1xf32>,
    %c0_18 = arith.constant 0 : index
    %c0_19 = arith.constant 0 : index
    %38 = vector.load %arg8[%c0_18, %c0_19] : memref<2x32xf32, #tpu.memory_space<vmem>>, vector<2x32xf32>
    %39 = vector.broadcast %28 : vector<2x1xf32> to vector<2x32xf32>
    %40 = arith.mulf %39, %38 : vector<2x32xf32>
    %41 = vector.shape_cast %31 : vector<2x8xf32> to vector<2x8x1xf32>
    %42 = vector.broadcast %41 : vector<2x8x1xf32> to vector<2x8x32xf32>
    %43 = arith.mulf %42, %3 : vector<2x8x32xf32>
    %cst_20 = arith.constant dense<0.000000e+00> : vector<2x32xf32>
    %44 = vector.multi_reduction <add>, %43, %cst_20 [1] : vector<2x8x32xf32> to vector<2x32xf32>
    %45 = arith.addf %40, %44 : vector<2x32xf32>
    %c0_21 = arith.constant 0 : index
    %c0_22 = arith.constant 0 : index
    %46 = vector.load %arg8[%c0_21, %c0_22] : memref<2x32xf32, #tpu.memory_space<vmem>>, vector<2x32xf32>
    tpu.vector_store %arg8[%c0_21, %c0_22], %45 {strides = array<i32>} : memref<2x32xf32, #tpu.memory_space<vmem>>, vector<2x32xf32>,
    %c0_23 = arith.constant 0 : index
    %c0_24 = arith.constant 0 : index
    %47 = vector.load %arg6[%c0_23, %c0_24] : memref<2x1xf32, #tpu.memory_space<vmem>>, vector<2x1xf32>
    tpu.vector_store %arg6[%c0_23, %c0_24], %26 {strides = array<i32>} : memref<2x1xf32, #tpu.memory_space<vmem>>, vector<2x1xf32>,
    %c0_i32_25 = arith.constant 0 : i32
    %48 = arith.cmpi eq, %arg1, %c0_i32_25 : i32
    %49 = arith.extui %48 : i1 to i32
    %c0_i32_26 = arith.constant 0 : i32
    %50 = arith.cmpi ne, %49, %c0_i32_26 : i32
    scf.if %50 {
      %c0_27 = arith.constant 0 : index
      %c0_28 = arith.constant 0 : index
      %51 = vector.load %arg8[%c0_27, %c0_28] : memref<2x32xf32, #tpu.memory_space<vmem>>, vector<2x32xf32>
      %c0_29 = arith.constant 0 : index
      %c0_30 = arith.constant 0 : index
      %52 = vector.load %arg7[%c0_29, %c0_30] : memref<2x1xf32, #tpu.memory_space<vmem>>, vector<2x1xf32>
      %53 = tpu.reciprocal %52 : vector<2x1xf32> -> vector<2x1xf32>
      %54 = vector.broadcast %53 : vector<2x1xf32> to vector<2x32xf32>
      %55 = arith.mulf %51, %54 : vector<2x32xf32>
      %c0_31 = arith.constant 0 : index
      %c0_32 = arith.constant 0 : index
      %56 = vector.load %arg5[%c0_31, %c0_32] : memref<2x32xf32, #tpu.memory_space<vmem>>, vector<2x32xf32>
      tpu.vector_store %arg5[%c0_31, %c0_32], %55 {strides = array<i32>} : memref<2x32xf32, #tpu.memory_space<vmem>>, vector<2x32xf32>,
    } else {
    }
    return
  }
  func.func @transform_0(%arg0: i32, %arg1: i32) -> (i32, i32, i32) {
    %c0_i32 = arith.constant 0 : i32
    %c0_i32_0 = arith.constant 0 : i32
    return %arg0, %arg1, %c0_i32 : i32, i32, i32
  }
  func.func @transform_1(%arg0: i32, %arg1: i32) -> (i32, i32) {
    %c0_i32 = arith.constant 0 : i32
    %c0_i32_0 = arith.constant 0 : i32
    %c0_i32_1 = arith.constant 0 : i32
    return %c0_i32, %c0_i32_0 : i32, i32
  }
  func.func @transform_2(%arg0: i32, %arg1: i32) -> (i32, i32) {
    %c0_i32 = arith.constant 0 : i32
    %c0_i32_0 = arith.constant 0 : i32
    %c0_i32_1 = arith.constant 0 : i32
    return %c0_i32, %c0_i32_0 : i32, i32
  }
  func.func @transform_3(%arg0: i32, %arg1: i32) -> (i32, i32) {
    %c0_i32 = arith.constant 0 : i32
    %c0_i32_0 = arith.constant 0 : i32
    return %arg0, %c0_i32 : i32, i32
  }
}

</mosaic_0001>

<llo_original>
// kernel: tpu_custom_call.1
$region0: #{tpu_custom_call.1}
  #allocation0 [shape = 'u32[]', space=smem, size = 0x4, offset = 0x4, fixed_abs, tag = 'smem constant byte address 0x4 - core index']
  #allocation1 [shape = 'u32[144,128]{1,0:T(1,128)}', space=vmem, size = 0x12000, scoped, tag = 'internal scratch']
  #allocation2 [shape = 'f32[2,1]{1,0:T(2,128)}', space=vmem, size = 0x400, scoped, tag = 'scratch operand']
  #allocation3 [shape = 'f32[2,1]{1,0:T(2,128)}', space=vmem, size = 0x400, scoped, tag = 'scratch operand']
  #allocation4 [shape = 'f32[2,32]{1,0:T(2,128)}', space=vmem, size = 0x400, scoped, tag = 'scratch operand']
  %s0 = inlined_call_operand.hbm [shape: f32[2,8,32], index: 0, kind: input, shape index: {}]
  %s1 = inlined_call_operand.hbm [shape: f32[32,256], index: 1, kind: input, shape index: {}]
  %s2 = inlined_call_operand.vmem [shape: f32[1,128], index: 2, kind: input, shape index: {}]
  %s3 = inlined_call_operand.hbm [shape: f32[2,32], index: 3, kind: output, shape index: {}]
  %s4 = sld [smem:[#allocation0]]
  $region38: #{tpu_custom_call.1} parent=0
    _
  %s6 = ssub.s32 1, %s4
  %s7 = scalar_select 0, %s6, %s4
  $region1: #{tpu_custom_call.1} parent=0
    #allocation5 [shape = 'u8[8192]{0}', space=vmem, size = 0x2000, scoped, tag = 'input window, operand 0, single buffered']
    #allocation6 [shape = 's32[1]{0}', space=sflag, size = 0x4, scoped, tag = 'scoped memory for tpu_custom_call.1']
    #allocation7 [shape = 's32[1]{0}', space=sflag, size = 0x4, scoped, tag = 'scoped memory for tpu_custom_call.1']
    #allocation8 [shape = 'u8[32768]{0}', space=vmem, size = 0x8000, scoped, tag = 'input window, operand 1, single buffered']
    #allocation9 [shape = 's32[1]{0}', space=sflag, size = 0x4, scoped, tag = 'scoped memory for tpu_custom_call.1']
    #allocation10 [shape = 'u8[1024]{0}', space=vmem, size = 0x400, scoped, tag = 'output window, operand 0, single buffered']
    %8 = vsyncpa [#allocation6], 0
    %9 = vsyncpa [#allocation9], 0
    %10 = vsyncpa [#allocation7], 0
    // Predicated region
    $region2: #{tpu_custom_call.1} parent=1 // pred_check
      _
    $region3: #{tpu_custom_call.1} parent=1 // pred_check_branch
      %12 = sbr.rel (0) target = $region5
    $region4: #{tpu_custom_call.1} parent=1 // pred_region
      %s14 = ssub.s32 256, 256
      %15 = vsyncadd [#allocation6], %s14
      %s16 = sshll.u32 [#allocation5], 4
      %s17 = int_to_ptr.vmem [resolvable:$true] %s16
      %22 = dma.hbm_to_vmem [thread:$0]  %s0, 256, %s17, [#allocation6], 128, 128, 8
    $region5: #{tpu_custom_call.1} parent=1 // pred_fallthru
      _
    // Predicated region
    $region6: #{tpu_custom_call.1} parent=1 // pred_check
      _
    $region7: #{tpu_custom_call.1} parent=1 // pred_check_branch
      %24 = sbr.rel (0) target = $region9
    $region8: #{tpu_custom_call.1} parent=1 // pred_region
      %s26 = ssub.s32 1024, 1024
      %27 = vsyncadd [#allocation9], %s26
      %s28 = sshll.u32 [#allocation8], 4
      %s29 = int_to_ptr.vmem [resolvable:$true] %s28
      %34 = dma.hbm_to_vmem [thread:$0]  %s1, 1024, %s29, [#allocation9], 256, 256, 16
    $region9: #{tpu_custom_call.1} parent=1 // pred_fallthru
      _
    // Predicated region
    $region10: #{tpu_custom_call.1} parent=1 // pred_check
      _
    $region11: #{tpu_custom_call.1} parent=1 // pred_check_branch
      %36 = sbr.rel (0) target = $region13
    $region12: #{tpu_custom_call.1} parent=1 // pred_region
      _
    $region13: #{tpu_custom_call.1} parent=1 // pred_fallthru
      _
    // Predicated region
    $region14: #{tpu_custom_call.1} parent=1 // pred_check
      _
    $region15: #{tpu_custom_call.1} parent=1 // pred_check_branch
      %38 = sbr.rel (0) target = $region17
    $region16: #{tpu_custom_call.1} parent=1 // pred_region
      %39 = dma.done [#allocation6], 256
    $region17: #{tpu_custom_call.1} parent=1 // pred_fallthru
      _
    // Predicated region
    $region18: #{tpu_custom_call.1} parent=1 // pred_check
      _
    $region19: #{tpu_custom_call.1} parent=1 // pred_check_branch
      %41 = sbr.rel (0) target = $region21
    $region20: #{tpu_custom_call.1} parent=1 // pred_region
      %42 = dma.done [#allocation9], 1024
    $region21: #{tpu_custom_call.1} parent=1 // pred_fallthru
      _
    %p43 = scmp.eq.s32.totalorder 0, 0
    // Predicated region
    $region22: #{tpu_custom_call.1} parent=1 // pred_check
      %p44 = pneg %p43
    $region23: #{tpu_custom_call.1} parent=1 // pred_check_branch
      %46 = sbr.rel (%p44) target = $region25
    $region24: #{tpu_custom_call.1} parent=1 // pred_region
      %vm47 = vcmask 1024
      %48 = vst.msk [vmem:[#allocation2] sm:$0x3] %vm47, -inf
      %49 = vst.msk [vmem:[#allocation3] sm:$0x3] %vm47, 0.0
      %vm50 = vcmask 254976
      %51 = vst.msk [vmem:[#allocation4] sm:$0x3] %vm50, 0.0
    $region25: #{tpu_custom_call.1} parent=1 // pred_fallthru
      _
    %v52 = vld [vmem:[#allocation5] sm:$0xff]
    %v53 = vld [vmem:[#allocation5 + $0x8] sm:$0xff]
    %v54 = vld [vmem:[#allocation8] sm:$0xff]
    %v55 = vld [vmem:[#allocation8 + $0x8] sm:$0xff]
    %v56 = vld [vmem:[#allocation8 + $0x10] sm:$0xff]
    %v57 = vld [vmem:[#allocation8 + $0x18] sm:$0xff]
    %v58 = vld [vmem:[#allocation8 + $0x20] sm:$0xff]
    %v59 = vld [vmem:[#allocation8 + $0x28] sm:$0xff]
    %v60 = vld [vmem:[#allocation8 + $0x30] sm:$0xff]
    %v61 = vld [vmem:[#allocation8 + $0x38] sm:$0xff]
    %vm62 = vcmask 261120
    %v64 = vsel %vm62, %v52, 0
    %v67 = vsel %vm62, %v53, 0
    %69 = vmatprep.subr.mxu0 %v55
    %70 = vmatpush1.msra.mxu0 %v54
    %71 = vmatprep.subr.mxu0 %v57
    %72 = vmatpush1.msra.mxu0 %v56
    %73 = vmatprep.subr.mxu0 %v59
    %74 = vmatpush1.msra.mxu0 %v58
    %75 = vmatprep.subr.mxu0 %v61
    %76 = vmatpush1.msra.mxu0 %v60
    %77 = vmatprep.subr.mxu0 0.0
    %78 = vmatpush1.msra.mxu0 0.0
    %79 = vmatprep.subr.mxu0 0.0
    %80 = vmatpush1.msra.mxu0 0.0
    %81 = vmatprep.subr.mxu0 0.0
    %82 = vmatpush1.msra.mxu0 0.0
    %83 = vmatprep.subr.mxu0 0.0
    %84 = vmatpush1.msra.mxu0 0.0
    %85 = vmatprep.subr.mxu0 0.0
    %86 = vmatpush1.msra.mxu0 0.0
    %87 = vmatprep.subr.mxu0 0.0
    %88 = vmatpush1.msra.mxu0 0.0
    %89 = vmatprep.subr.mxu0 0.0
    %90 = vmatpush1.msra.mxu0 0.0
    %91 = vmatprep.subr.mxu0 0.0
    %92 = vmatpush1.msra.mxu0 0.0
    %93 = vmatprep.subr.mxu0 0.0
    %94 = vmatpush1.msra.mxu0 0.0
    %95 = vmatprep.subr.mxu0 0.0
    %96 = vmatpush1.msra.mxu0 0.0
    %97 = vmatprep.subr.mxu0 0.0
    %98 = vmatpush1.msra.mxu0 0.0
    %99 = vmatprep.subr.mxu0 0.0
    %100 = vmatpush1.msra.mxu0 0.0
    %101 = vmatprep.subr.mxu0 0.0
    %102 = vmatpush1.msra.mxu0 0.0
    %103 = vmatprep.subr.mxu0 0.0
    %104 = vmatpush1.msra.mxu0 0.0
    %105 = vmatprep.subr.mxu0 0.0
    %106 = vmatpush1.msra.mxu0 0.0
    %107 = vmatprep.subr.mxu0 0.0
    %108 = vmatpush1.msra.mxu0 0.0
    %109 = vmatprep.subr.mxu0 0.0
    %110 = vmatpush1.msra.mxu0 0.0
    %111 = vmatprep.subr.mxu0 0.0
    %112 = vmatpush1.msra.mxu0 0.0
    %113 = vmatprep.subr.mxu0 0.0
    %114 = vmatpush1.msra.mxu0 0.0
    %115 = vmatprep.subr.mxu0 0.0
    %116 = vmatpush1.msra.mxu0 0.0
    %117 = vmatprep.subr.mxu0 0.0
    %118 = vmatpush1.msra.mxu0 0.0
    %119 = vmatprep.subr.mxu0 0.0
    %120 = vmatpush1.msra.mxu0 0.0
    %121 = vmatprep.subr.mxu0 0.0
    %122 = vmatpush1.msra.mxu0 0.0
    %123 = vmatprep.subr.mxu0 0.0
    %124 = vmatpush1.msra.mxu0 0.0
    %125 = vmatprep.subr.mxu0 0.0
    %126 = vmatpush1.msra.mxu0 0.0
    %127 = vmatprep.subr.mxu0 0.0
    %128 = vmatpush1.msra.mxu0 0.0
    %129 = vmatprep.subr.mxu0 0.0
    %130 = vmatpush1.msra.mxu0 0.0
    %131 = vmatprep.subr.mxu0 0.0
    %132 = vmatpush1.msra.mxu0 0.0
    %133 = vmatprep.mubr.f32.mxu0 0.0
    %134 = vmatmul.mubr.f32.gmra.mrb[0].mxu0 %v64
    %v135 = vpop.f32.mrb[0].mxu0
    %v136 = vadd.f32 0.0, %v135
    %v137 = vpop.f32.mrb[0].mxu0
    %v138 = vadd.f32 0.0, %v137
    %139 = vmatprep.mubr.f32.mxu0 0.0
    %140 = vmatmul.mubr.f32.gmra.mrb[0].mxu0 %v67
    %v141 = vpop.f32.mrb[0].mxu0
    %v142 = vadd.f32 0.0, %v141
    %v143 = vpop.f32.mrb[0].mxu0
    %v144 = vadd.f32 0.0, %v143
    %145 = vdwg.mxu0
    %v146 = vmax.f32 %v136, 0.0
    %v147 = vmax.f32 %v142, 0.0
    %v148 = vxor.u32 %v138, 2147483648
    %v149 = vxor.u32 %v144, 2147483648
    %v150 = vmul.f32 %v148, 1.442695
    %v151 = vpow.pop %v150
    %v152 = vmul.f32 %v149, 1.442695
    %v153 = vpow.pop %v152
    %v154 = vadd.f32 %v151, 1.0
    %v155 = vadd.f32 %v153, 1.0
    %v156 = vrcp.pop %v154
    %v157 = vmul.f32 1.0, %v156
    %v158 = vrcp.pop %v155
    %v159 = vmul.f32 1.0, %v158
    %v160 = vmul.f32 %v146, %v157
    %v161 = vmul.f32 %v147, %v159
    %v162 = vld [vmem:[%s2] sm:$0x1]
    %v164 = vlaneseq
    %v165 = vshrl.u32 %v164, 7
    %v166 = vsub.s32 0, %v165
    %v167 = vrot.slane %v162, %v166
    %v169 = vmul.f32 %v160, %v167
    %v170 = vmul.f32 %v161, %v167
    %171 = vadd.xlane.f32.xlu0 %v169
    %v172 = vpop.xlane.xlu0 %171
    %173 = vadd.xlane.f32.xlu0 %v170
    %v174 = vpop.xlane.xlu0 %173
    %v175 = vld [vmem:[#allocation2] sm:$0x3]
    %v178 = vlaneseq
    %v179 = vand.u32 %v178, 127
    %v180 = vlaneseq
    %v181 = vshrl.u32 %v180, 7
    %v182 = vsub.s32 %v179, %v181
    %v183 = vrot.slane %v172, %v182
    %v184 = vlaneseq
    %v185 = vshrl.u32 %v184, 7
    %v186 = vsub.s32 %v179, %v185
    %v187 = vrot.slane %v174, %v186
    %vm188 = vcmask 1041409
    %v189 = vsel %vm188, %v187, %v183
    %vm191 = vcmask 58368
    %v192 = vsel %vm191, %v189, -inf
    %193 = vmax.xlane.f32.xlu0 %v192
    %v194 = vpop.xlane.xlu0 %193
    %v195 = vmax.f32 %v175, %v194
    %v196 = vsub.f32 %v175, %v195
    %v197 = vmul.f32 %v196, 1.442695
    %v198 = vpow.pop %v197
    %200 = vset.pattern.permute.xlu0 0
    %201 = vperm.xlu0 %200, %v195
    %v202 = vpop.permute.xlu0 %201
    %v203 = vlaneseq
    %v204 = vshrl.u32 %v203, 7
    %v205 = vsub.s32 0, %v204
    %v206 = vrot.slane %v202, %v205
    %v207 = vlaneseq
    %v208 = vshrl.u32 %v207, 7
    %v209 = vsub.s32 1, %v208
    %v210 = vrot.slane %v202, %v209
    %v213 = vsub.f32 %v172, %v206
    %v214 = vsub.f32 %v174, %v210
    %v215 = vmul.f32 %v213, 1.442695
    %v216 = vpow.pop %v215
    %v217 = vmul.f32 %v214, 1.442695
    %v218 = vpow.pop %v217
    %v219 = vld [vmem:[#allocation3] sm:$0x3]
    %v220 = vmul.f32 %v198, %v219
    %223 = vset.pattern.permute.xlu0 0
    %224 = vperm.xlu0 %223, %v216
    %v225 = vpop.permute.xlu0 %224
    %226 = vset.pattern.permute.xlu0 0
    %227 = vperm.xlu0 %226, %v218
    %v228 = vpop.permute.xlu0 %227
    %v229 = vlaneseq
    %v230 = vshrl.u32 %v229, 7
    %v231 = vsub.s32 %v179, %v230
    %v232 = vrot.slane %v225, %v231
    %v233 = vlaneseq
    %v234 = vshrl.u32 %v233, 7
    %v235 = vsub.s32 %v179, %v234
    %v236 = vrot.slane %v228, %v235
    %v237 = vsel %vm188, %v236, %v232
    %v239 = vsel %vm191, %v237, 0.0
    %240 = vadd.xlane.f32.xlu0 %v239
    %v241 = vpop.xlane.xlu0 %240
    %v242 = vadd.f32 %v220, %v241
    %vm243 = vcmask 1024
    %244 = vst.msk [vmem:[#allocation3] sm:$0x3] %vm243, %v242
    %v245 = vld [vmem:[#allocation4] sm:$0x3]
    %247 = vset.pattern.permute.xlu0 0
    %248 = vperm.xlu0 %247, %v198
    %v249 = vpop.permute.xlu0 %248
    %v251 = vmul.f32 %v249, %v245
    %v254 = vmul.f32 %v225, %v52
    %v255 = vmul.f32 %v228, %v53
    %v256 = vsel %vm62, %v254, 0.0
    %v257 = vrot.slane %v256, 4
    %v258 = vadd.f32 %v256, %v257
    %v259 = vrot.slane %v258, 2
    %v260 = vadd.f32 %v258, %v259
    %v261 = vrot.slane %v260, 1
    %v262 = vadd.f32 %v260, %v261
    %v263 = vsel %vm62, %v255, 0.0
    %v264 = vrot.slane %v263, 4
    %v265 = vadd.f32 %v263, %v264
    %v266 = vrot.slane %v265, 2
    %v267 = vadd.f32 %v265, %v266
    %v268 = vrot.slane %v267, 1
    %v269 = vadd.f32 %v267, %v268
    %v272 = vsel %vm188, %v269, %v262
    %v274 = vadd.f32 %v251, %v272
    %vm275 = vcmask 254976
    %276 = vst.msk [vmem:[#allocation4] sm:$0x3] %vm275, %v274
    %277 = vst.msk [vmem:[#allocation2] sm:$0x3] %vm243, %v195
    // Predicated region
    $region26: #{tpu_custom_call.1} parent=1 // pred_check
      %p278 = pneg %p43
    $region27: #{tpu_custom_call.1} parent=1 // pred_check_branch
      %280 = sbr.rel (%p278) target = $region29
    $region28: #{tpu_custom_call.1} parent=1 // pred_region
      %v281 = vld [vmem:[#allocation4] sm:$0x3]
      %v282 = vld [vmem:[#allocation3] sm:$0x3]
      %v283 = vrcp.pop %v282
      %285 = vset.pattern.permute.xlu0 0
      %286 = vperm.xlu0 %285, %v283
      %v287 = vpop.permute.xlu0 %286
      %v289 = vmul.f32 %v281, %v287
      %290 = vst.msk [vmem:[#allocation10] sm:$0x3] %vm275, %v289
    $region29: #{tpu_custom_call.1} parent=1 // pred_fallthru
      _
    // Predicated region
    $region30: #{tpu_custom_call.1} parent=1 // pred_check
      _
    $region31: #{tpu_custom_call.1} parent=1 // pred_check_branch
      %292 = sbr.rel (0) target = $region33
    $region32: #{tpu_custom_call.1} parent=1 // pred_region
      %s294 = ssub.s32 32, 32
      %295 = vsyncadd [#allocation7], %s294
      %s297 = sshll.u32 [#allocation10], 4
      %s298 = int_to_ptr.vmem [resolvable:$true] %s297
      %300 = dma.vmem_to_hbm [thread:$0]  %s298, 32, %s3, [#allocation7]
    $region33: #{tpu_custom_call.1} parent=1 // pred_fallthru
      _
    // Predicated region
    $region34: #{tpu_custom_call.1} parent=1 // pred_check
      _
    $region35: #{tpu_custom_call.1} parent=1 // pred_check_branch
      %302 = sbr.rel (0) target = $region37
    $region36: #{tpu_custom_call.1} parent=1 // pred_region
      %303 = dma.done [#allocation7], 32
    $region37: #{tpu_custom_call.1} parent=1 // pred_fallthru
      _
    %304 = vsyncpa [#allocation6], 1
    %305 = vsyncpa [#allocation9], 1
    %306 = vsyncpa [#allocation7], 1

</llo_original>
